<compile_context>
chip_gen: v5e
topology: v5e:2x2
jax: 0.10.0
libtpu: 0.0.40
codegen_flags: <defaults>
</compile_context>

<pallas_src>
import functools

import jax
import jax.numpy as jnp
from jax.experimental import pallas as pl
from jax.experimental.pallas import tpu as pltpu

_MiB = 2 ** 20


def _round_up(a: int, b: int) -> int:
    return ((a + b - 1) // b) * b


def _device_defaults():
    """Returns (default row tile tm, default hidden tile tn, VMEM-limit ceiling)."""
    kind = ""
    try:
        kind = jax.devices()[0].device_kind.lower()
    except Exception:
        pass
    if "v7" in kind:   # v7x: 64 MiB VMEM per TensorCore -> smaller tn, tighter cap
        return 512, 256, 48 * _MiB
    if "v6" in kind:   # v6e: 128 MiB VMEM; needs ~tm>=768 to reach MXU roofline
        return 1024, 512, 100 * _MiB
    if "v5" in kind:   # v5e/v5p: ~240 flops/byte crossover; bigger tm buys little
        return 384, 512, 100 * _MiB
    return 256, 512, 48 * _MiB   # unknown generation: conservative


# ---------------------------------------------------------------------------
# Kernels
# ---------------------------------------------------------------------------

def _ffn_resident_kernel(x_ref, w1_ref, b1_ref, w2_ref, b2_ref, o_ref):
    """Fast path: full W1/W2 resident in VMEM, one row tile per grid step."""
    h = jnp.dot(x_ref[...], w1_ref[...], preferred_element_type=jnp.float32)
    h = jnp.maximum(h + b1_ref[...], 0.0)
    out = jnp.dot(h.astype(w2_ref.dtype), w2_ref[...],
                  preferred_element_type=jnp.float32)
    o_ref[...] = (out + b2_ref[...]).astype(o_ref.dtype)


def _ffn_streamed_kernel(x_ref, w1_ref, b1_ref, w2_ref, b2_ref, o_ref, *scratch):
    """Streamed path: one (row tile i, hidden slice j) step, reduced over j.

    For f32 outputs no scratch is passed; the output block (constant block
    index over j, hence VMEM-resident) is used directly as the accumulator.
    """
    acc_ref = scratch[0] if scratch else o_ref
    j = pl.program_id(1)

    @pl.when(j == 0)
    def _():
        acc_ref[...] = jnp.zeros_like(acc_ref)

    # (tm, C) @ (C, tn) on the MXU (f32 acc); bias + ReLU on the VPU.
    h = jnp.dot(x_ref[...], w1_ref[...], preferred_element_type=jnp.float32)
    h = jnp.maximum(h + b1_ref[...], 0.0)
    # (tm, tn) @ (tn, C), accumulated into the resident f32 block.
    acc_ref[...] += jnp.dot(h.astype(w2_ref.dtype), w2_ref[...],
                            preferred_element_type=jnp.float32)

    @pl.when(j == pl.num_programs(1) - 1)
    def _():
        o_ref[...] = (acc_ref[...] + b2_ref[...]).astype(o_ref.dtype)


# ---------------------------------------------------------------------------
# VMEM footprint models (conservative: all blocked operands double-buffered)
# ---------------------------------------------------------------------------

def _fast_footprint(tm, Cp, Hp, osz):
    return (2 * tm * Cp * 2          # x tile (bf16)
            + 2 * tm * Cp * osz      # out tile
            + 2 * (Cp * Hp * 2) * 2  # full W1 + W2 (bf16)
            + 2 * (Hp + Cp) * 4      # biases (f32)
            + tm * Hp * 4            # h intermediate
            + tm * Cp * 4)           # f32 result before cast


def _streamed_footprint(tm, tn, Cp, osz, use_scratch):
    return (2 * tm * Cp * 2
            + 2 * tm * Cp * osz
            + 2 * (Cp * tn * 2) * 2  # W1 slice + W2 slice (bf16)
            + 2 * (tn + Cp) * 4
            + tm * tn * 4            # h intermediate
            + (tm * Cp * 4 if use_scratch else 0))


# ---------------------------------------------------------------------------
# Wrapper
# ---------------------------------------------------------------------------

@functools.partial(jax.jit, static_argnames=("out_dtype", "tm", "tn"))
def feed_forward(x, w1, b1, w2, b2, *, out_dtype=None, tm=None, tn=None):
    """x: (B, T, C) -> relu(x @ W1 + b1) @ W2 + b2, shape (B, T, C).

    Contract: matmuls run with bf16 operands / f32 accumulation (pass bf16
    weights to skip the wrapper cast). out_dtype defaults to x.dtype; pass
    jnp.bfloat16 to halve output VMEM/HBM traffic in a bf16 pipeline.
    """
    B, T, C = x.shape
    H = w1.shape[1]                 # 4 * n_embd
    M = B * T
    out_dtype = jnp.dtype(out_dtype) if out_dtype is not None else x.dtype
    osz = jnp.dtype(out_dtype).itemsize

    tm_def, tn_def, vmem_cap = _device_defaults()
    tm_def = tm if tm is not None else tm_def
    tn_def = tn if tn is not None else tn_def

    # ---- tile sizing -------------------------------------------------------
    Cp = _round_up(C, 128)          # lane-dense stores, aligned MXU K/N dims
    Hp128 = _round_up(H, 128)
    tm_eff = min(tm_def, _round_up(M, 16))   # 16-row multiple: bf16 packing
    use_scratch = out_dtype != jnp.float32

    fast_path = _fast_footprint(tm_eff, Cp, Hp128, osz) <= vmem_cap
    if fast_path:
        tn_eff, Hp = Hp128, Hp128
        footprint = _fast_footprint(tm_eff, Cp, Hp, osz)
    else:
        tn_eff = min(tn_def, Hp128)
        # Shrink the row tile first, then the hidden tile, until we fit budget.
        while (_streamed_footprint(tm_eff, tn_eff, Cp, osz, use_scratch) > vmem_cap
               and tm_eff > 256):
            tm_eff = _round_up(max(256, tm_eff // 2), 16)
        while (_streamed_footprint(tm_eff, tn_eff, Cp, osz, use_scratch) > vmem_cap
               and tn_eff > 128):
            tn_eff = max(128, _round_up(tn_eff // 2, 128))
        Hp = _round_up(H, tn_eff)
        footprint = _streamed_footprint(tm_eff, tn_eff, Cp, osz, use_scratch)

    Mp = _round_up(M, tm_eff)
    n_row_tiles = Mp // tm_eff

    # ---- pad + cast (each operand rewritten at most once) -------------------
    # Zero padding is exact: padded hidden units give relu(0 + 0) = 0 and hit
    # zero W2 rows; padded C columns of W2/b2 produce zeros that are sliced off;
    # padded rows are sliced off.
    x2d = x.reshape(M, C)
    if x2d.dtype != jnp.bfloat16:
        x2d = x2d.astype(jnp.bfloat16)
    if Mp > M or Cp > C:
        x2d = jnp.pad(x2d, ((0, Mp - M), (0, Cp - C)))

    w1p = w1 if w1.dtype == jnp.bfloat16 else w1.astype(jnp.bfloat16)
    w2p = w2 if w2.dtype == jnp.bfloat16 else w2.astype(jnp.bfloat16)
    b1p = b1.reshape(1, -1).astype(jnp.float32)
    b2p = b2.reshape(1, -1).astype(jnp.float32)
    if Cp > C or Hp > H:
        w1p = jnp.pad(w1p, ((0, Cp - C), (0, Hp - H)))
        w2p = jnp.pad(w2p, ((0, Hp - H), (0, Cp - C)))
        b1p = jnp.pad(b1p, ((0, 0), (0, Hp - H)))
        b2p = jnp.pad(b2p, ((0, 0), (0, Cp - C)))

    # ---- cost estimate (accounts for weight re-streaming) -------------------
    weight_bytes = (w1p.size + w2p.size) * 2 + (b1p.size + b2p.size) * 4
    if not fast_path:
        weight_bytes *= n_row_tiles
    cost = pl.CostEstimate(
        flops=4 * Mp * Cp * Hp,
        transcendentals=0,
        bytes_accessed=Mp * Cp * 2 + Mp * Cp * osz + weight_bytes,
    )

    vmem_limit = int(min(vmem_cap, max(32 * _MiB, footprint * 3 // 2)))

    # ---- specs ---------------------------------------------------------------
    if fast_path:
        grid = (n_row_tiles,)
        in_specs = [
            pl.BlockSpec((tm_eff, Cp), lambda i: (i, 0)),   # x rows
            pl.BlockSpec((Cp, Hp), lambda i: (0, 0)),       # W1 (resident)
            pl.BlockSpec((1, Hp), lambda i: (0, 0)),        # b1
            pl.BlockSpec((Hp, Cp), lambda i: (0, 0)),       # W2 (resident)
            pl.BlockSpec((1, Cp), lambda i: (0, 0)),        # b2
        ]
        out_spec = pl.BlockSpec((tm_eff, Cp), lambda i: (i, 0))
        scratch = []
        kernel = _ffn_resident_kernel
        dim_sem = ("parallel",)
    else:
        grid = (n_row_tiles, Hp // tn_eff)
        in_specs = [
            pl.BlockSpec((tm_eff, Cp), lambda i, j: (i, 0)),   # x rows (resident over j)
            pl.BlockSpec((Cp, tn_eff), lambda i, j: (0, j)),   # W1 hidden slice
            pl.BlockSpec((1, tn_eff), lambda i, j: (0, j)),    # b1 hidden slice
            pl.BlockSpec((tn_eff, Cp), lambda i, j: (j, 0)),   # W2 hidden slice
            pl.BlockSpec((1, Cp), lambda i, j: (0, 0)),        # b2
        ]
        out_spec = pl.BlockSpec((tm_eff, Cp), lambda i, j: (i, 0))
        scratch = [pltpu.VMEM((tm_eff, Cp), jnp.float32)] if use_scratch else []
        kernel = _ffn_streamed_kernel
        dim_sem = ("parallel", "arbitrary")

    out2d = pl.pallas_call(
        kernel,
        out_shape=jax.ShapeDtypeStruct((Mp, Cp), out_dtype),
        grid_spec=pltpu.PrefetchScalarGridSpec(
            num_scalar_prefetch=0,
            grid=grid,
            in_specs=in_specs,
            out_specs=out_spec,
            scratch_shapes=scratch,
        ),
        compiler_params=pltpu.CompilerParams(
            dimension_semantics=dim_sem,
            vmem_limit_bytes=vmem_limit,
        ),
        cost_estimate=cost,
    )(x2d, w1p, b1p, w2p, b2p)

    return out2d[:M, :C].reshape(B, T, C)


def init_params(key, n_embd):
    """Deterministic init matching nn.Linear shapes (PyTorch-style uniform bounds)."""
    h = 4 * n_embd
    k1, k2, k3, k4 = jax.random.split(key, 4)
    bound1 = 1.0 / jnp.sqrt(n_embd)
    bound2 = 1.0 / jnp.sqrt(h)
    # Stored already transposed for x @ W (PyTorch stores (out, in); we use (in, out)).
    w1 = jax.random.uniform(k1, (n_embd, h), jnp.float32, -bound1, bound1)
    b1 = jax.random.uniform(k2, (1, h), jnp.float32, -bound1, bound1)
    w2 = jax.random.uniform(k3, (h, n_embd), jnp.float32, -bound2, bound2)
    b2 = jax.random.uniform(k4, (1, n_embd), jnp.float32, -bound2, bound2)
    return w1, b1, w2, b2


if __name__ == "__main__":
    key = jax.random.PRNGKey(0)
    B, T, n_embd = 2, 8, 32

    k_x, k_p = jax.random.split(key)
    x = jax.random.normal(k_x, (B, T, n_embd), jnp.float32)
    w1, b1, w2, b2 = init_params(k_p, n_embd)

    out = feed_forward(x, w1, b1, w2, b2)
    out = jax.block_until_ready(out)

    # Reference in plain JAX f32 (same math as the PyTorch module).
    # Loose tolerance: the kernel computes with bf16 operands / f32 accumulation.
    ref = jnp.maximum(x.reshape(-1, n_embd) @ w1 + b1, 0.0) @ w2 + b2
    ref = ref.reshape(B, T, n_embd)
    assert out.shape == (B, T, n_embd)
    assert out.dtype == x.dtype
    assert jnp.allclose(out, ref, atol=5e-2, rtol=5e-2), (
        float(jnp.max(jnp.abs(out - ref)))
    )

    print("KERNEL_OK")
</pallas_src>

<mosaic_0001>
module attributes {stable_mosaic.version = 11 : i64} {
  func.func @_ffn_resident_kernel(%arg0: i32, %arg1: memref<16x128xbf16, #tpu.memory_space<vmem>>, %arg2: memref<128x128xbf16, #tpu.memory_space<vmem>>, %arg3: memref<1x128xf32, #tpu.memory_space<vmem>>, %arg4: memref<128x128xbf16, #tpu.memory_space<vmem>>, %arg5: memref<1x128xf32, #tpu.memory_space<vmem>>, %arg6: memref<16x128xf32, #tpu.memory_space<vmem>>) attributes {dimension_semantics = [#tpu.dimension_semantics<parallel>], iteration_bounds = array<i64: 1>, scalar_prefetch = 0 : i64, scratch_operands = 0 : i64, tpu.core_type = #tpu.core_type<tc>, window_params = [{transform_indices = @transform_0, window_bounds = array<i64: 16, 128>}, {pipeline_mode = #tpu.pipeline_mode<synchronous>, transform_indices = @transform_1, window_bounds = array<i64: 128, 128>}, {pipeline_mode = #tpu.pipeline_mode<synchronous>, transform_indices = @transform_2, window_bounds = array<i64: 1, 128>}, {pipeline_mode = #tpu.pipeline_mode<synchronous>, transform_indices = @transform_3, window_bounds = array<i64: 128, 128>}, {pipeline_mode = #tpu.pipeline_mode<synchronous>, transform_indices = @transform_4, window_bounds = array<i64: 1, 128>}, {transform_indices = @transform_5, window_bounds = array<i64: 16, 128>}]} {
    %c0 = arith.constant 0 : index
    %c0_0 = arith.constant 0 : index
    %0 = vector.load %arg1[%c0, %c0_0] : memref<16x128xbf16, #tpu.memory_space<vmem>>, vector<16x128xbf16>
    %c0_1 = arith.constant 0 : index
    %c0_2 = arith.constant 0 : index
    %1 = vector.load %arg2[%c0_1, %c0_2] : memref<128x128xbf16, #tpu.memory_space<vmem>>, vector<128x128xbf16>
    %cst = arith.constant dense<0.000000e+00> : vector<16x128xf32>
    %2 = tpu.matmul %0, %1, %cst {dimension_numbers = #tpu.dot_dimension_numbers<[1], [0], [0], [1], [0, 0, 1, 1], [], []>} : vector<16x128xbf16>, vector<128x128xbf16>, vector<16x128xf32> -> vector<16x128xf32>
    %c0_3 = arith.constant 0 : index
    %c0_4 = arith.constant 0 : index
    %3 = vector.load %arg3[%c0_3, %c0_4] : memref<1x128xf32, #tpu.memory_space<vmem>>, vector<1x128xf32>
    %4 = vector.broadcast %3 : vector<1x128xf32> to vector<16x128xf32>
    %5 = arith.addf %2, %4 : vector<16x128xf32>
    %cst_5 = arith.constant 0.000000e+00 : f32
    %6 = vector.broadcast %cst_5 : f32 to vector<16x128xf32>
    %7 = arith.maximumf %5, %6 : vector<16x128xf32>
    %8 = arith.truncf %7 : vector<16x128xf32> to vector<16x128xbf16>
    %c0_6 = arith.constant 0 : index
    %c0_7 = arith.constant 0 : index
    %9 = vector.load %arg4[%c0_6, %c0_7] : memref<128x128xbf16, #tpu.memory_space<vmem>>, vector<128x128xbf16>
    %cst_8 = arith.constant dense<0.000000e+00> : vector<16x128xf32>
    %10 = tpu.matmul %8, %9, %cst_8 {dimension_numbers = #tpu.dot_dimension_numbers<[1], [0], [0], [1], [0, 0, 1, 1], [], []>} : vector<16x128xbf16>, vector<128x128xbf16>, vector<16x128xf32> -> vector<16x128xf32>
    %c0_9 = arith.constant 0 : index
    %c0_10 = arith.constant 0 : index
    %11 = vector.load %arg5[%c0_9, %c0_10] : memref<1x128xf32, #tpu.memory_space<vmem>>, vector<1x128xf32>
    %12 = vector.broadcast %11 : vector<1x128xf32> to vector<16x128xf32>
    %13 = arith.addf %10, %12 : vector<16x128xf32>
    %c0_11 = arith.constant 0 : index
    %c0_12 = arith.constant 0 : index
    %14 = vector.load %arg6[%c0_11, %c0_12] : memref<16x128xf32, #tpu.memory_space<vmem>>, vector<16x128xf32>
    tpu.vector_store %arg6[%c0_11, %c0_12], %13 {strides = array<i32>} : memref<16x128xf32, #tpu.memory_space<vmem>>, vector<16x128xf32>,
    return
  }
  func.func @transform_0(%arg0: i32) -> (i32, i32) {
    %c0_i32 = arith.constant 0 : i32
    %c0_i32_0 = arith.constant 0 : i32
    return %arg0, %c0_i32 : i32, i32
  }
  func.func @transform_1(%arg0: i32) -> (i32, i32) {
    %c0_i32 = arith.constant 0 : i32
    %c0_i32_0 = arith.constant 0 : i32
    %c0_i32_1 = arith.constant 0 : i32
    return %c0_i32, %c0_i32_0 : i32, i32
  }
  func.func @transform_2(%arg0: i32) -> (i32, i32) {
    %c0_i32 = arith.constant 0 : i32
    %c0_i32_0 = arith.constant 0 : i32
    %c0_i32_1 = arith.constant 0 : i32
    return %c0_i32, %c0_i32_0 : i32, i32
  }
  func.func @transform_3(%arg0: i32) -> (i32, i32) {
    %c0_i32 = arith.constant 0 : i32
    %c0_i32_0 = arith.constant 0 : i32
    %c0_i32_1 = arith.constant 0 : i32
    return %c0_i32, %c0_i32_0 : i32, i32
  }
  func.func @transform_4(%arg0: i32) -> (i32, i32) {
    %c0_i32 = arith.constant 0 : i32
    %c0_i32_0 = arith.constant 0 : i32
    %c0_i32_1 = arith.constant 0 : i32
    return %c0_i32, %c0_i32_0 : i32, i32
  }
  func.func @transform_5(%arg0: i32) -> (i32, i32) {
    %c0_i32 = arith.constant 0 : i32
    %c0_i32_0 = arith.constant 0 : i32
    return %arg0, %c0_i32 : i32, i32
  }
}

</mosaic_0001>

<llo_original>
// kernel: feed_forward.1
$region0: #{feed_forward.1}
  #allocation0 [shape = 'u32[]', space=smem, size = 0x4, offset = 0x4, fixed_abs, tag = 'smem constant byte address 0x4 - core index']
  #allocation1 [shape = 'u32[72,128]{1,0:T(1,128)}', space=vmem, size = 0x9000, scoped, tag = 'internal scratch']
  %s0 = inlined_call_operand.vmem [shape: bf16[16,128], index: 0, kind: input, shape index: {}]
  %s1 = inlined_call_operand.vmem [shape: bf16[128,128], index: 1, kind: input, shape index: {}]
  %s2 = inlined_call_operand.vmem [shape: f32[1,128], index: 2, kind: input, shape index: {}]
  %s3 = inlined_call_operand.vmem [shape: bf16[128,128], index: 3, kind: input, shape index: {}]
  %s4 = inlined_call_operand.vmem [shape: f32[1,128], index: 4, kind: input, shape index: {}]
  %s5 = inlined_call_operand.vmem [shape: f32[16,128], index: 5, kind: output, shape index: {}]
  %s6 = sld [smem:[#allocation0]]
  $region30: #{feed_forward.1} parent=0
    _
  %s8 = ssub.s32 1, %s6
  %s9 = scalar_select 0, %s8, %s6
  // Predicated region
  $region2: #{feed_forward.1} parent=0 // pred_check
    _
  $region3: #{feed_forward.1} parent=0 // pred_check_branch
    %11 = sbr.rel (0) target = $region5
  $region4: #{feed_forward.1} parent=0 // pred_region
    _
  $region5: #{feed_forward.1} parent=0 // pred_fallthru
    _
  // Predicated region
  $region6: #{feed_forward.1} parent=0 // pred_check
    _
  $region7: #{feed_forward.1} parent=0 // pred_check_branch
    %13 = sbr.rel (0) target = $region9
  $region8: #{feed_forward.1} parent=0 // pred_region
    _
  $region9: #{feed_forward.1} parent=0 // pred_fallthru
    _
  // Predicated region
  $region10: #{feed_forward.1} parent=0 // pred_check
    _
  $region11: #{feed_forward.1} parent=0 // pred_check_branch
    %15 = sbr.rel (0) target = $region13
  $region12: #{feed_forward.1} parent=0 // pred_region
    _
  $region13: #{feed_forward.1} parent=0 // pred_fallthru
    _
  // Predicated region
  $region14: #{feed_forward.1} parent=0 // pred_check
    _
  $region15: #{feed_forward.1} parent=0 // pred_check_branch
    %17 = sbr.rel (0) target = $region17
  $region16: #{feed_forward.1} parent=0 // pred_region
    _
  $region17: #{feed_forward.1} parent=0 // pred_fallthru
    _
  // Predicated region
  $region18: #{feed_forward.1} parent=0 // pred_check
    _
  $region19: #{feed_forward.1} parent=0 // pred_check_branch
    %19 = sbr.rel (0) target = $region21
  $region20: #{feed_forward.1} parent=0 // pred_region
    _
  $region21: #{feed_forward.1} parent=0 // pred_fallthru
    _
  %v20 = vld [vmem:[%s0] sm:$0xf]
  %v21 = vld [vmem:[%s0 + $0x4] sm:$0xf]
  %v22 = vld [vmem:[%s1] sm:$0xf]
  %v23 = vld [vmem:[%s1 + $0x4] sm:$0xf]
  %v24 = vld [vmem:[%s1 + $0x8] sm:$0xf]
  %v25 = vld [vmem:[%s1 + $0xc] sm:$0xf]
  %v26 = vld [vmem:[%s1 + $0x10] sm:$0xf]
  %v27 = vld [vmem:[%s1 + $0x14] sm:$0xf]
  %v28 = vld [vmem:[%s1 + $0x18] sm:$0xf]
  %v29 = vld [vmem:[%s1 + $0x1c] sm:$0xf]
  %v30 = vld [vmem:[%s1 + $0x20] sm:$0xf]
  %v31 = vld [vmem:[%s1 + $0x24] sm:$0xf]
  %v32 = vld [vmem:[%s1 + $0x28] sm:$0xf]
  %v33 = vld [vmem:[%s1 + $0x2c] sm:$0xf]
  %v34 = vld [vmem:[%s1 + $0x30] sm:$0xf]
  %v35 = vld [vmem:[%s1 + $0x34] sm:$0xf]
  %v36 = vld [vmem:[%s1 + $0x38] sm:$0xf]
  %v37 = vld [vmem:[%s1 + $0x3c] sm:$0xf]
  %v38 = vld [vmem:[%s2] sm:$0x1]
  %v40 = vperm.slane %v38, 0
  %v44 = vunpack.c.l.b16 %v20
  %v45 = vunpack.c.l.b16 %v21
  %v46 = vpack.c.b16 %v45, %v44
  %v64 = vunpack.c.l.b16 %v22
  %v65 = vunpack.c.l.b16 %v23
  %v66 = vunpack.c.l.b16 %v24
  %v67 = vunpack.c.l.b16 %v25
  %v68 = vunpack.c.l.b16 %v26
  %v69 = vunpack.c.l.b16 %v27
  %v70 = vunpack.c.l.b16 %v28
  %v71 = vunpack.c.l.b16 %v29
  %v72 = vunpack.c.l.b16 %v30
  %v73 = vunpack.c.l.b16 %v31
  %v74 = vunpack.c.l.b16 %v32
  %v75 = vunpack.c.l.b16 %v33
  %v76 = vunpack.c.l.b16 %v34
  %v77 = vunpack.c.l.b16 %v35
  %v78 = vunpack.c.l.b16 %v36
  %v79 = vunpack.c.l.b16 %v37
  %v80 = vpack.c.b16 %v65, %v64
  %v81 = vpack.c.b16 %v67, %v66
  %v82 = vpack.c.b16 %v69, %v68
  %v83 = vpack.c.b16 %v71, %v70
  %v84 = vpack.c.b16 %v73, %v72
  %v85 = vpack.c.b16 %v75, %v74
  %v86 = vpack.c.b16 %v77, %v76
  %v87 = vpack.c.b16 %v79, %v78
  %96 = vmatpush.bf16.msra.mxu0 %v87
  %97 = vmatpush.bf16.msra.mxu0 %v86
  %98 = vmatpush.bf16.msra.mxu0 %v85
  %99 = vmatpush.bf16.msra.mxu0 %v84
  %100 = vmatpush.bf16.msra.mxu0 %v83
  %101 = vmatpush.bf16.msra.mxu0 %v82
  %102 = vmatpush.bf16.msra.mxu0 %v81
  %103 = vmatpush.bf16.msra.mxu0 %v80
  %104 = vmatmul.bf16.gmra.mxu0 %v46
  %v105 = vpop.f32.mrf.mxu0
  %v106 = vadd.f32 %v40, %v105
  %v107 = vpop.f32.mrf.mxu0
  %v108 = vadd.f32 %v40, %v107
  %109 = vdwg.mxu0
  %v110 = vmax.f32 %v106, 0.0
  %v111 = vmax.f32 %v108, 0.0
  %v112 = vpack.c.bf16 %v111, %v110
  %v113 = vld [vmem:[%s3] sm:$0xf]
  %v114 = vld [vmem:[%s3 + $0x4] sm:$0xf]
  %v115 = vld [vmem:[%s3 + $0x8] sm:$0xf]
  %v116 = vld [vmem:[%s3 + $0xc] sm:$0xf]
  %v117 = vld [vmem:[%s3 + $0x10] sm:$0xf]
  %v118 = vld [vmem:[%s3 + $0x14] sm:$0xf]
  %v119 = vld [vmem:[%s3 + $0x18] sm:$0xf]
  %v120 = vld [vmem:[%s3 + $0x1c] sm:$0xf]
  %v121 = vld [vmem:[%s3 + $0x20] sm:$0xf]
  %v122 = vld [vmem:[%s3 + $0x24] sm:$0xf]
  %v123 = vld [vmem:[%s3 + $0x28] sm:$0xf]
  %v124 = vld [vmem:[%s3 + $0x2c] sm:$0xf]
  %v125 = vld [vmem:[%s3 + $0x30] sm:$0xf]
  %v126 = vld [vmem:[%s3 + $0x34] sm:$0xf]
  %v127 = vld [vmem:[%s3 + $0x38] sm:$0xf]
  %v128 = vld [vmem:[%s3 + $0x3c] sm:$0xf]
  %v129 = vld [vmem:[%s4] sm:$0x1]
  %v131 = vperm.slane %v129, 0
  %v149 = vunpack.c.l.b16 %v113
  %v150 = vunpack.c.l.b16 %v114
  %v151 = vunpack.c.l.b16 %v115
  %v152 = vunpack.c.l.b16 %v116
  %v153 = vunpack.c.l.b16 %v117
  %v154 = vunpack.c.l.b16 %v118
  %v155 = vunpack.c.l.b16 %v119
  %v156 = vunpack.c.l.b16 %v120
  %v157 = vunpack.c.l.b16 %v121
  %v158 = vunpack.c.l.b16 %v122
  %v159 = vunpack.c.l.b16 %v123
  %v160 = vunpack.c.l.b16 %v124
  %v161 = vunpack.c.l.b16 %v125
  %v162 = vunpack.c.l.b16 %v126
  %v163 = vunpack.c.l.b16 %v127
  %v164 = vunpack.c.l.b16 %v128
  %v165 = vpack.c.b16 %v150, %v149
  %v166 = vpack.c.b16 %v152, %v151
  %v167 = vpack.c.b16 %v154, %v153
  %v168 = vpack.c.b16 %v156, %v155
  %v169 = vpack.c.b16 %v158, %v157
  %v170 = vpack.c.b16 %v160, %v159
  %v171 = vpack.c.b16 %v162, %v161
  %v172 = vpack.c.b16 %v164, %v163
  %181 = vmatpush.bf16.msra.mxu0 %v172
  %182 = vmatpush.bf16.msra.mxu0 %v171
  %183 = vmatpush.bf16.msra.mxu0 %v170
  %184 = vmatpush.bf16.msra.mxu0 %v169
  %185 = vmatpush.bf16.msra.mxu0 %v168
  %186 = vmatpush.bf16.msra.mxu0 %v167
  %187 = vmatpush.bf16.msra.mxu0 %v166
  %188 = vmatpush.bf16.msra.mxu0 %v165
  %189 = vmatmul.bf16.gmra.mxu0 %v112
  %v190 = vpop.f32.mrf.mxu0
  %v191 = vadd.f32 %v131, %v190
  %v192 = vpop.f32.mrf.mxu0
  %v193 = vadd.f32 %v131, %v192
  %194 = vdwg.mxu0
  %195 = vst [vmem:[%s5] sm:$0xff] %v191
  %196 = vst [vmem:[%s5 + $0x8] sm:$0xff] %v193
  // Predicated region
  $region22: #{feed_forward.1} parent=0 // pred_check
    _
  $region23: #{feed_forward.1} parent=0 // pred_check_branch
    %198 = sbr.rel (0) target = $region25
  $region24: #{feed_forward.1} parent=0 // pred_region
    _
  $region25: #{feed_forward.1} parent=0 // pred_fallthru
    _
  // Predicated region
  $region26: #{feed_forward.1} parent=0 // pred_check
    _
  $region27: #{feed_forward.1} parent=0 // pred_check_branch
    %200 = sbr.rel (0) target = $region29
  $region28: #{feed_forward.1} parent=0 // pred_region
    _
  $region29: #{feed_forward.1} parent=0 // pred_fallthru
    _

</llo_original>
